<compile_context>
chip_gen: v5e
topology: v5e:2x2
jax: 0.10.0
libtpu: 0.0.40
codegen_flags: <defaults>
</compile_context>

<pallas_src>
import jax
import jax.numpy as jnp
import numpy as np
from jax.experimental import pallas as pl
from jax.experimental.pallas import tpu as pltpu


def _round_up(x, m):
    return (x + m - 1) // m * m


def _cdiv(a, b):
    return -(-a // b)


def _make_kernel(C, HW, tile, cps):
    """Kernel closure over static shape parameters."""

    def kernel(w_ref, logits_ref, bins_ref, gt_ref, wsum_ref, cnt_ref):
        s = pl.program_id(0)          # v7x pixel-chunk split index
        i = pl.program_id(2)          # pixel-chunk index within the split

        @pl.when(i == 0)
        def _init():
            wsum_ref[...] = jnp.zeros_like(wsum_ref)
            cnt_ref[...] = jnp.zeros_like(cnt_ref)

        # Ragged-tail / duplicated-chunk mask (replaces the wrapper-side pad).
        lane = jax.lax.broadcasted_iota(jnp.int32, (1, tile), 1)
        base = (s * cps + i) * tile
        in_range = (base + lane) < HW                                    # (1, tile)

        # Softmax pieces: classes on sublanes, pixels lane-dense (128 lanes).
        x = logits_ref[0].astype(jnp.float32)                            # (C, tile)
        xc = x - jnp.max(x, axis=0, keepdims=True)
        lse = jnp.log(jnp.sum(jnp.exp(xc), axis=0, keepdims=True))       # (1, tile)

        # t[c, p] = sum_c' W[c, c'] * xc[c', p] — tiny-K matmul pinned to a
        # single bf16 MXU pass with f32 accumulation.
        t = jnp.dot(w_ref[...].astype(jnp.bfloat16),
                    xc.astype(jnp.bfloat16),
                    preferred_element_type=jnp.float32)                  # (C, tile)

        bins = bins_ref[0].astype(jnp.int32)                             # (1, tile)
        cls = jax.lax.broadcasted_iota(jnp.int32, (C, tile), 0)
        # sel[p] = t[bins[p], p]  (sublane reduce lands on the XLU slot).
        sel = jnp.sum(jnp.where(cls == bins, t, 0.0), axis=0, keepdims=True)

        # Rows of W sum to 1 (normalized in the wrapper, as in __init__), so
        #   sum_c W[b, c] * (xc[c] - lse) == sel - lse.
        # Out-of-range bins (and masked lanes) contribute exactly 0, matching
        # the module's (gt_bins == arange(C)) one-hot behavior.
        valid_bin = in_range & (bins >= 0) & (bins < C)
        wsum_ref[0] += jnp.where(valid_bin, sel - lse, 0.0)
        cnt_ref[0] += (in_range & (gt_ref[0] > 0.0)).astype(jnp.float32)

    return kernel


def wcel_loss(pred_logit, gt_bins, gt, weight, *, tile_hw=32768):
    """Forward pass of WCEL_Loss.

    pred_logit: (N, C, H, W) float; gt_bins: (N, H, W) int; gt: (N, H, W) float;
    weight: (C, C) float (row-normalized here, exactly as the module __init__).
    """
    N, C, H, W = pred_logit.shape
    HW = H * W

    # Row-normalize the weight as the module's __init__ does (idempotent if the
    # caller already normalized); this also makes the rowsum(W)==1 factoring
    # used in the kernel exact.
    w = (weight / jnp.sum(weight, axis=1, keepdims=True)).astype(jnp.float32)

    # Free, contiguous views.  No pad, no dtype upcasts (casts happen in-kernel).
    logits = pred_logit.reshape(N, C, HW)
    bins = gt_bins.reshape(N, 1, HW)
    gtf = gt.reshape(N, 1, HW)

    # ---- VMEM-aware tile selection ----------------------------------------
    try:
        vmem_cap = int(pltpu.get_tpu_info().vmem_capacity_bytes)
    except Exception:
        vmem_cap = 64 << 20                       # conservative: v7x per-TC size
    vmem_limit = int(min(vmem_cap // 2, 48 << 20))  # 32 MiB on v7x, 48 MiB v5e/v6e
    budget = vmem_limit // 3                        # working-set target w/ headroom

    isz_l = jnp.dtype(pred_logit.dtype).itemsize
    isz_b = jnp.dtype(gt_bins.dtype).itemsize
    isz_g = jnp.dtype(gt.dtype).itemsize
    # 2x double-buffered inputs + ~5 (C,tile)-f32-equivalent temporaries + rows.
    per_pixel = 2 * C * isz_l + 2 * (isz_b + isz_g) + 22 * C + 64

    tile = min(tile_hw, budget // per_pixel, _round_up(HW, 128))
    tile = max(128, (tile // 128) * 128)
    chunks = _cdiv(HW, tile)
    tile = _round_up(_cdiv(HW, chunks), 128)        # rebalance to minimize tail waste
    chunks = _cdiv(HW, tile)

    # 2-way pixel-chunk split keeps both v7x TensorCores busy when the batch
    # axis alone cannot (N == 1 or odd).  No effect on v5e/v6e (single TC).
    splits = 2 if (N % 2 == 1 and chunks >= 2) else 1
    cps = _cdiv(chunks, splits)

    last = chunks - 1
    pix_idx = lambda s, i: jnp.minimum(s * cps + i, last)  # clamp fully-OOB chunks

    grid = (splits, N, cps)
    out_shape = (jax.ShapeDtypeStruct((splits * N, 1, tile), jnp.float32),
                 jax.ShapeDtypeStruct((splits * N, 1, tile), jnp.float32))

    cost = pl.CostEstimate(
        flops=int(N * HW * (2 * C * C + 10 * C)),
        transcendentals=int(N * HW * (C + 1)),
        bytes_accessed=int(N * HW * (C * isz_l + isz_b + isz_g)
                           + 4 * C * C + 8 * splits * N * tile),
    )

    wsum, cnt = pl.pallas_call(
        _make_kernel(C, HW, tile, cps),
        out_shape=out_shape,
        grid_spec=pltpu.PrefetchScalarGridSpec(
            num_scalar_prefetch=0,
            grid=grid,
            in_specs=[
                pl.BlockSpec((C, C), lambda s, n, i: (0, 0)),                    # weight (resident)
                pl.BlockSpec((1, C, tile), lambda s, n, i: (n, 0, pix_idx(s, i))),  # logits tile
                pl.BlockSpec((1, 1, tile), lambda s, n, i: (n, 0, pix_idx(s, i))),  # gt_bins tile
                pl.BlockSpec((1, 1, tile), lambda s, n, i: (n, 0, pix_idx(s, i))),  # gt tile
            ],
            out_specs=(
                pl.BlockSpec((1, 1, tile), lambda s, n, i: (s * N + n, 0, 0)),   # weighted-logp partials
                pl.BlockSpec((1, 1, tile), lambda s, n, i: (s * N + n, 0, 0)),   # valid-pixel partials
            ),
        ),
        compiler_params=pltpu.CompilerParams(
            dimension_semantics=("parallel", "parallel", "arbitrary"),
            vmem_limit_bytes=vmem_limit),
        cost_estimate=cost,
    )(w, logits, bins, gtf)

    # Tiny final combine in plain JAX.  Matches the PyTorch module: divides by
    # sum(gt > 0) with NO zero-guard (inf/nan when there are no valid pixels).
    return -(jnp.sum(wsum) / jnp.sum(cnt))


def _reference(pred_logit, gt_bins, gt, weight):
    """Pure-JAX replica of the exact PyTorch module semantics."""
    _, C, _, _ = pred_logit.shape
    w = weight / jnp.sum(weight, axis=1, keepdims=True)
    logits = jnp.transpose(pred_logit, (0, 2, 3, 1)).reshape(-1, C).astype(jnp.float32)
    logp = jax.nn.log_softmax(logits, axis=-1)
    one_hot = (gt_bins.reshape(-1, 1) == jnp.arange(C)).astype(jnp.float32)
    w_rows = one_hot @ w
    valid = jnp.sum((gt > 0.0).astype(jnp.float32))
    return -jnp.sum(w_rows * logp) / valid


if __name__ == "__main__":
    key = jax.random.PRNGKey(0)
    k1, k2, k3, k4, k5, k6 = jax.random.split(key, 6)

    # --- Check 1: batch=2, C=8, ragged spatial extent (17x15 -> 255 pixels),
    #     small tile to exercise multi-chunk accumulation + tail masking. -----
    N, C, H, W = 2, 8, 17, 15
    pred_logit = jax.random.normal(k1, (N, C, H, W), dtype=jnp.float32)
    gt_bins = jax.random.randint(k2, (N, H, W), 0, C, dtype=jnp.int32)
    gt = jax.random.uniform(k3, (N, H, W), minval=-0.5, maxval=1.0, dtype=jnp.float32)
    idx = np.arange(C)
    W0 = jnp.asarray(np.exp(-0.2 * np.abs(idx[:, None] - idx[None, :])).astype(np.float32))

    loss = jax.block_until_ready(wcel_loss(pred_logit, gt_bins, gt, W0, tile_hw=128))
    loss_ref = _reference(pred_logit, gt_bins, gt, W0)
    np.testing.assert_allclose(np.asarray(loss), np.asarray(loss_ref), rtol=5e-3, atol=1e-3)

    # --- Check 2: batch=1 (exercises the 2-way core split + chunk clamp). ----
    N2, C2, H2, W2 = 1, 8, 20, 15
    pred_logit2 = jax.random.normal(k4, (N2, C2, H2, W2), dtype=jnp.float32)
    gt_bins2 = jax.random.randint(k5, (N2, H2, W2), 0, C2, dtype=jnp.int32)
    gt2 = jax.random.uniform(k6, (N2, H2, W2), minval=-0.5, maxval=1.0, dtype=jnp.float32)
    idx2 = np.arange(C2)
    W02 = jnp.asarray(np.exp(-0.15 * np.abs(idx2[:, None] - idx2[None, :])).astype(np.float32))

    loss2 = jax.block_until_ready(wcel_loss(pred_logit2, gt_bins2, gt2, W02, tile_hw=128))
    loss_ref2 = _reference(pred_logit2, gt_bins2, gt2, W02)
    np.testing.assert_allclose(np.asarray(loss2), np.asarray(loss_ref2), rtol=5e-3, atol=1e-3)

    print("KERNEL_OK")
</pallas_src>

<mosaic_0001>
module attributes {stable_mosaic.version = 11 : i64} {
  func.func @kernel(%arg0: i32, %arg1: i32, %arg2: i32, %arg3: memref<8x8xf32, #tpu.memory_space<vmem>>, %arg4: memref<1x8x128xf32, #tpu.memory_space<vmem>>, %arg5: memref<1x1x128xi32, #tpu.memory_space<vmem>>, %arg6: memref<1x1x128xf32, #tpu.memory_space<vmem>>, %arg7: memref<1x1x128xf32, #tpu.memory_space<vmem>>, %arg8: memref<1x1x128xf32, #tpu.memory_space<vmem>>) attributes {dimension_semantics = [#tpu.dimension_semantics<parallel>, #tpu.dimension_semantics<parallel>, #tpu.dimension_semantics<arbitrary>], iteration_bounds = array<i64: 1, 2, 2>, scalar_prefetch = 0 : i64, scratch_operands = 0 : i64, tpu.core_type = #tpu.core_type<tc>, window_params = [{pipeline_mode = #tpu.pipeline_mode<synchronous>, transform_indices = @transform_0, window_bounds = array<i64: 8, 8>}, {transform_indices = @transform_1, window_bounds = array<i64: 1, 8, 128>}, {transform_indices = @transform_2, window_bounds = array<i64: 1, 1, 128>}, {transform_indices = @transform_3, window_bounds = array<i64: 1, 1, 128>}, {transform_indices = @transform_4, window_bounds = array<i64: 1, 1, 128>}, {transform_indices = @transform_5, window_bounds = array<i64: 1, 1, 128>}]} {
    %c0_i32 = arith.constant 0 : i32
    %0 = arith.cmpi eq, %arg2, %c0_i32 : i32
    %1 = arith.extui %0 : i1 to i32
    %c0_i32_0 = arith.constant 0 : i32
    %2 = arith.cmpi ne, %1, %c0_i32_0 : i32
    scf.if %2 {
      %cst_30 = arith.constant 0.000000e+00 : f32
      %62 = vector.broadcast %cst_30 : f32 to vector<1x1x128xf32>
      %c0_31 = arith.constant 0 : index
      %c0_32 = arith.constant 0 : index
      %c0_33 = arith.constant 0 : index
      %63 = vector.load %arg7[%c0_31, %c0_32, %c0_33] : memref<1x1x128xf32, #tpu.memory_space<vmem>>, vector<1x1x128xf32>
      tpu.vector_store %arg7[%c0_31, %c0_32, %c0_33], %62 {strides = array<i32>} : memref<1x1x128xf32, #tpu.memory_space<vmem>>, vector<1x1x128xf32>,
      %cst_34 = arith.constant 0.000000e+00 : f32
      %64 = vector.broadcast %cst_34 : f32 to vector<1x1x128xf32>
      %c0_35 = arith.constant 0 : index
      %c0_36 = arith.constant 0 : index
      %c0_37 = arith.constant 0 : index
      %65 = vector.load %arg8[%c0_35, %c0_36, %c0_37] : memref<1x1x128xf32, #tpu.memory_space<vmem>>, vector<1x1x128xf32>
      tpu.vector_store %arg8[%c0_35, %c0_36, %c0_37], %64 {strides = array<i32>} : memref<1x1x128xf32, #tpu.memory_space<vmem>>, vector<1x1x128xf32>,
    } else {
    }
    %3 = tpu.iota {dimensions = array<i32: 1>} : vector<1x128xi32>
    %c2_i32 = arith.constant 2 : i32
    %4 = arith.muli %arg0, %c2_i32 : i32
    %5 = arith.addi %4, %arg2 : i32
    %c128_i32 = arith.constant 128 : i32
    %6 = arith.muli %5, %c128_i32 : i32
    %7 = vector.broadcast %6 : i32 to vector<1x128xi32>
    %8 = arith.addi %7, %3 : vector<1x128xi32>
    %c255_i32 = arith.constant 255 : i32
    %9 = vector.broadcast %c255_i32 : i32 to vector<1x128xi32>
    %10 = arith.cmpi slt, %8, %9 : vector<1x128xi32>
    %c0 = arith.constant 0 : index
    %c0_1 = arith.constant 0 : index
    %c0_2 = arith.constant 0 : index
    %11 = vector.load %arg4[%c0, %c0_1, %c0_2] : memref<1x8x128xf32, #tpu.memory_space<vmem>>, vector<1x8x128xf32>
    %12 = vector.shape_cast %11 : vector<1x8x128xf32> to vector<8x128xf32>
    %cst = arith.constant dense<0xFF800000> : vector<128xf32>
    %13 = vector.multi_reduction <maximumf>, %12, %cst [0] : vector<8x128xf32> to vector<128xf32>
    %14 = vector.shape_cast %13 : vector<128xf32> to vector<1x128xf32>
    %15 = vector.broadcast %14 : vector<1x128xf32> to vector<8x128xf32>
    %16 = arith.subf %12, %15 : vector<8x128xf32>
    %17 = math.exp %16 : vector<8x128xf32>
    %cst_3 = arith.constant dense<0.000000e+00> : vector<128xf32>
    %18 = vector.multi_reduction <add>, %17, %cst_3 [0] : vector<8x128xf32> to vector<128xf32>
    %19 = vector.shape_cast %18 : vector<128xf32> to vector<1x128xf32>
    %20 = math.log %19 : vector<1x128xf32>
    %c0_4 = arith.constant 0 : index
    %c0_5 = arith.constant 0 : index
    %21 = vector.load %arg3[%c0_4, %c0_5] : memref<8x8xf32, #tpu.memory_space<vmem>>, vector<8x8xf32>
    %22 = arith.truncf %21 : vector<8x8xf32> to vector<8x8xbf16>
    %23 = arith.truncf %16 : vector<8x128xf32> to vector<8x128xbf16>
    %cst_6 = arith.constant dense<0.000000e+00> : vector<8x128xf32>
    %24 = tpu.matmul %22, %23, %cst_6 {dimension_numbers = #tpu.dot_dimension_numbers<[1], [0], [0], [1], [0, 0, 1, 1], [], []>} : vector<8x8xbf16>, vector<8x128xbf16>, vector<8x128xf32> -> vector<8x128xf32>
    %c0_7 = arith.constant 0 : index
    %c0_8 = arith.constant 0 : index
    %c0_9 = arith.constant 0 : index
    %25 = vector.load %arg5[%c0_7, %c0_8, %c0_9] : memref<1x1x128xi32, #tpu.memory_space<vmem>>, vector<1x1x128xi32>
    %26 = vector.shape_cast %25 : vector<1x1x128xi32> to vector<1x128xi32>
    %27 = tpu.iota {dimensions = array<i32: 0>} : vector<8x128xi32>
    %28 = vector.broadcast %26 : vector<1x128xi32> to vector<8x128xi32>
    %29 = arith.cmpi eq, %27, %28 : vector<8x128xi32>
    %cst_10 = arith.constant 0.000000e+00 : f32
    %30 = vector.broadcast %cst_10 : f32 to vector<8x128xf32>
    %31 = arith.select %29, %24, %30 : vector<8x128xi1>, vector<8x128xf32>
    %cst_11 = arith.constant dense<0.000000e+00> : vector<128xf32>
    %32 = vector.multi_reduction <add>, %31, %cst_11 [0] : vector<8x128xf32> to vector<128xf32>
    %33 = vector.shape_cast %32 : vector<128xf32> to vector<1x128xf32>
    %c0_i32_12 = arith.constant 0 : i32
    %34 = vector.broadcast %c0_i32_12 : i32 to vector<1x128xi32>
    %35 = arith.cmpi sge, %26, %34 : vector<1x128xi32>
    %36 = arith.andi %10, %35 : vector<1x128xi1>
    %c8_i32 = arith.constant 8 : i32
    %37 = vector.broadcast %c8_i32 : i32 to vector<1x128xi32>
    %38 = arith.cmpi slt, %26, %37 : vector<1x128xi32>
    %39 = arith.andi %36, %38 : vector<1x128xi1>
    %c0_13 = arith.constant 0 : index
    %c0_14 = arith.constant 0 : index
    %c0_15 = arith.constant 0 : index
    %40 = vector.load %arg7[%c0_13, %c0_14, %c0_15] : memref<1x1x128xf32, #tpu.memory_space<vmem>>, vector<1x1x128xf32>
    %41 = vector.shape_cast %40 : vector<1x1x128xf32> to vector<1x128xf32>
    %42 = arith.subf %33, %20 : vector<1x128xf32>
    %cst_16 = arith.constant 0.000000e+00 : f32
    %43 = vector.broadcast %cst_16 : f32 to vector<1x128xf32>
    %44 = arith.select %39, %42, %43 : vector<1x128xi1>, vector<1x128xf32>
    %45 = arith.addf %41, %44 : vector<1x128xf32>
    %c0_17 = arith.constant 0 : index
    %c0_18 = arith.constant 0 : index
    %c0_19 = arith.constant 0 : index
    %46 = vector.load %arg7[%c0_17, %c0_18, %c0_19] : memref<1x1x128xf32, #tpu.memory_space<vmem>>, vector<1x1x128xf32>
    %47 = vector.shape_cast %46 : vector<1x1x128xf32> to vector<1x128xf32>
    %48 = vector.shape_cast %45 : vector<1x128xf32> to vector<1x1x128xf32>
    tpu.vector_store %arg7[%c0_17, %c0_18, %c0_19], %48 {strides = array<i32>} : memref<1x1x128xf32, #tpu.memory_space<vmem>>, vector<1x1x128xf32>,
    %c0_20 = arith.constant 0 : index
    %c0_21 = arith.constant 0 : index
    %c0_22 = arith.constant 0 : index
    %49 = vector.load %arg8[%c0_20, %c0_21, %c0_22] : memref<1x1x128xf32, #tpu.memory_space<vmem>>, vector<1x1x128xf32>
    %50 = vector.shape_cast %49 : vector<1x1x128xf32> to vector<1x128xf32>
    %c0_23 = arith.constant 0 : index
    %c0_24 = arith.constant 0 : index
    %c0_25 = arith.constant 0 : index
    %51 = vector.load %arg6[%c0_23, %c0_24, %c0_25] : memref<1x1x128xf32, #tpu.memory_space<vmem>>, vector<1x1x128xf32>
    %52 = vector.shape_cast %51 : vector<1x1x128xf32> to vector<1x128xf32>
    %cst_26 = arith.constant 0.000000e+00 : f32
    %53 = vector.broadcast %cst_26 : f32 to vector<1x128xf32>
    %54 = arith.cmpf ogt, %52, %53 : vector<1x128xf32>
    %55 = arith.andi %10, %54 : vector<1x128xi1>
    %56 = arith.extui %55 : vector<1x128xi1> to vector<1x128xi32>
    %57 = arith.sitofp %56 : vector<1x128xi32> to vector<1x128xf32>
    %58 = arith.addf %50, %57 : vector<1x128xf32>
    %c0_27 = arith.constant 0 : index
    %c0_28 = arith.constant 0 : index
    %c0_29 = arith.constant 0 : index
    %59 = vector.load %arg8[%c0_27, %c0_28, %c0_29] : memref<1x1x128xf32, #tpu.memory_space<vmem>>, vector<1x1x128xf32>
    %60 = vector.shape_cast %59 : vector<1x1x128xf32> to vector<1x128xf32>
    %61 = vector.shape_cast %58 : vector<1x128xf32> to vector<1x1x128xf32>
    tpu.vector_store %arg8[%c0_27, %c0_28, %c0_29], %61 {strides = array<i32>} : memref<1x1x128xf32, #tpu.memory_space<vmem>>, vector<1x1x128xf32>,
    return
  }
  func.func @transform_0(%arg0: i32, %arg1: i32, %arg2: i32) -> (i32, i32) {
    %c0_i32 = arith.constant 0 : i32
    %c0_i32_0 = arith.constant 0 : i32
    %c0_i32_1 = arith.constant 0 : i32
    return %c0_i32, %c0_i32_0 : i32, i32
  }
  func.func @transform_1(%arg0: i32, %arg1: i32, %arg2: i32) -> (i32, i32, i32) {
    %c2_i32 = arith.constant 2 : i32
    %0 = arith.muli %arg0, %c2_i32 : i32
    %1 = arith.addi %0, %arg2 : i32
    %c1_i32 = arith.constant 1 : i32
    %2 = arith.minsi %1, %c1_i32 : i32
    %c0_i32 = arith.constant 0 : i32
    %c0_i32_0 = arith.constant 0 : i32
    return %arg1, %c0_i32, %2 : i32, i32, i32
  }
  func.func @transform_2(%arg0: i32, %arg1: i32, %arg2: i32) -> (i32, i32, i32) {
    %c2_i32 = arith.constant 2 : i32
    %0 = arith.muli %arg0, %c2_i32 : i32
    %1 = arith.addi %0, %arg2 : i32
    %c1_i32 = arith.constant 1 : i32
    %2 = arith.minsi %1, %c1_i32 : i32
    %c0_i32 = arith.constant 0 : i32
    %c0_i32_0 = arith.constant 0 : i32
    return %arg1, %c0_i32, %2 : i32, i32, i32
  }
  func.func @transform_3(%arg0: i32, %arg1: i32, %arg2: i32) -> (i32, i32, i32) {
    %c2_i32 = arith.constant 2 : i32
    %0 = arith.muli %arg0, %c2_i32 : i32
    %1 = arith.addi %0, %arg2 : i32
    %c1_i32 = arith.constant 1 : i32
    %2 = arith.minsi %1, %c1_i32 : i32
    %c0_i32 = arith.constant 0 : i32
    %c0_i32_0 = arith.constant 0 : i32
    return %arg1, %c0_i32, %2 : i32, i32, i32
  }
  func.func @transform_4(%arg0: i32, %arg1: i32, %arg2: i32) -> (i32, i32, i32) {
    %c2_i32 = arith.constant 2 : i32
    %0 = arith.muli %arg0, %c2_i32 : i32
    %1 = arith.addi %0, %arg1 : i32
    %c0_i32 = arith.constant 0 : i32
    %c0_i32_0 = arith.constant 0 : i32
    %c0_i32_1 = arith.constant 0 : i32
    return %1, %c0_i32, %c0_i32_0 : i32, i32, i32
  }
  func.func @transform_5(%arg0: i32, %arg1: i32, %arg2: i32) -> (i32, i32, i32) {
    %c2_i32 = arith.constant 2 : i32
    %0 = arith.muli %arg0, %c2_i32 : i32
    %1 = arith.addi %0, %arg1 : i32
    %c0_i32 = arith.constant 0 : i32
    %c0_i32_0 = arith.constant 0 : i32
    %c0_i32_1 = arith.constant 0 : i32
    return %1, %c0_i32, %c0_i32_0 : i32, i32, i32
  }
}

</mosaic_0001>

<llo_original>
// kernel: tpu_custom_call.1
$region0: #{tpu_custom_call.1}
  #allocation0 [shape = 'u32[]', space=smem, size = 0x4, offset = 0x4, fixed_abs, tag = 'smem constant byte address 0x4 - core index']
  #allocation1 [shape = 'u32[72,128]{1,0:T(1,128)}', space=vmem, size = 0x9000, scoped, tag = 'internal scratch']
  %s0 = inlined_call_operand.hbm [shape: f32[8,8], index: 0, kind: input, shape index: {}]
  %s1 = inlined_call_operand.hbm [shape: f32[2,8,255], index: 1, kind: input, shape index: {}]
  %s2 = inlined_call_operand.hbm [shape: s32[2,1,255], index: 2, kind: input, shape index: {}]
  %s3 = inlined_call_operand.hbm [shape: f32[2,1,255], index: 3, kind: input, shape index: {}]
  %s4 = inlined_call_operand.hbm [shape: f32[2,1,128], index: 4, kind: output, shape index: {0}]
  %s5 = inlined_call_operand.hbm [shape: f32[2,1,128], index: 5, kind: output, shape index: {1}]
  %6 = xla_tuple %s4, %s5
  %s7 = sld [smem:[#allocation0]]
  $region77: #{tpu_custom_call.1} parent=0
    _
  %s9 = ssub.s32 1, %s7
  %s10 = scalar_select 0, %s9, %s7
  $region1: #{tpu_custom_call.1} parent=0
    #allocation2 [shape = 'u8[4096]{0}', space=vmem, size = 0x1000, scoped, tag = 'input window, operand 0, single buffered']
    #allocation3 [shape = 's32[2]{0}', space=sflag, size = 0x8, scoped, tag = 'scoped memory for tpu_custom_call.1']
    #allocation4 [shape = 's32[2]{0}', space=sflag, size = 0x8, scoped, tag = 'scoped memory for tpu_custom_call.1']
    #allocation5 [shape = 'u8[8192]{0}', space=vmem, size = 0x2000, scoped, tag = 'input window, operand 1']
    #allocation6 [shape = 's32[2]{0}', space=sflag, size = 0x8, scoped, tag = 'scoped memory for tpu_custom_call.1']
    #allocation7 [shape = 'u8[1024]{0}', space=vmem, size = 0x400, scoped, tag = 'input window, operand 2']
    #allocation8 [shape = 'u8[1024]{0}', space=vmem, size = 0x400, scoped, tag = 'input window, operand 3']
    #allocation9 [shape = 's32[2]{0}', space=sflag, size = 0x8, scoped, tag = 'scoped memory for tpu_custom_call.1']
    #allocation10 [shape = 'u8[1024]{0}', space=vmem, size = 0x400, scoped, tag = 'output window, operand 0']
    #allocation11 [shape = 'u8[1024]{0}', space=vmem, size = 0x400, scoped, tag = 'output window, operand 1']
    #allocation12 [shape = 's32[2]{0}', space=sflag, size = 0x8, scoped, tag = 'scoped memory for tpu_custom_call.1']
    %11 = vsyncpa [#allocation3], 0
    %12 = vsyncpa [#allocation6], 0
    %s13 = scalar_lea.sflag [#allocation6], 1
    %14 = vsyncpa %s13, 0
    %15 = vsyncpa [#allocation9], 0
    %s16 = scalar_lea.sflag [#allocation9], 1
    %17 = vsyncpa %s16, 0
    %18 = vsyncpa [#allocation4], 0
    %s19 = scalar_lea.sflag [#allocation4], 1
    %20 = vsyncpa %s19, 0
    %21 = vsyncpa [#allocation12], 0
    %s22 = scalar_lea.sflag [#allocation12], 1
    %23 = vsyncpa %s22, 0
    loop: start=0, step=1, limit=6
    $region2: #{tpu_custom_call.1} parent=1 // loop_pre_header
      _
    $region3: #{tpu_custom_call.1} parent=1 // loop_header
      %s25 = sphi 0, %s29
      %p26 = scmp.ge.s32.totalorder %s25, 6
      %s32 = sphi 0, %s51
      %s33 = sphi 0, %s47
      %s34 = sphi 0, %s43
      %s35 = sphi 0, %s32
      %s36 = sphi 0, %s33
      %s37 = sphi 0, %s34
      %s38 = sphi 0, %s35
      %s39 = sphi 0, %s36
      %s40 = sphi 0, %s37
      %s52 = sphi 0, %s52
      %s54 = sphi 0, %s52
      %s55 = sphi 0, %s54
      %s69 = sphi 0, %s55
      %s85 = sphi 0, %s87
      %s88 = sphi 0, %s85
      %s89 = sphi 0, %s88
      %s105 = sphi 0, %s89
      %s121 = sphi 0, %s123
      %s124 = sphi 0, %s121
      %s125 = sphi 0, %s124
      %s141 = sphi 0, %s125
      %s157 = sphi 0, %s159
      %s160 = sphi 0, %s157
      %s161 = sphi 0, %s160
      %s177 = sphi 0, %s161
      %s187 = sphi 0, %s189
      %s190 = sphi 0, %s187
      %s191 = sphi 0, %s190
      %s207 = sphi 0, %s191
      %s217 = sphi 0, %s219
      %s220 = sphi 0, %s217
      %s221 = sphi 0, %s220
      %s237 = sphi 0, %s221
    $region4: #{tpu_custom_call.1} parent=1 // loop_header_branch
      %28 = sbr.rel (%p26) target = $region8
    $region5: #{tpu_custom_call.1} parent=1 // loop_body
      %s30 = ssub.s32 %s25, 1
      %s31 = ssub.s32 %s25, 2
      %s41 = sadd.s32 1, %s34
      %p42 = scmp.ge.s32.totalorder %s41, 2
      %s43 = scalar_select %p42, 0, %s41
      %s44 = sadd.s32 1, %s33
      %s45 = scalar_select %p42, %s44, %s33
      %p46 = scmp.ge.s32.totalorder %s45, 2
      %s47 = scalar_select %p46, 0, %s45
      %s48 = sadd.s32 1, %s32
      %s49 = scalar_select %p46, %s48, %s32
      %p50 = scmp.ge.s32.totalorder %s49, 1
      %s51 = scalar_select %p50, 0, %s49
      %s53 = sadd.s32 %s52, 1
      %p56 = scmp.eq.s32.totalorder %s25, 3
      %p57 = scmp.ne.s32.totalorder %s52, %s54
      %p58 = scmp.eq.s32.totalorder %s25, 0
      %p59 = por %p57, %p58
      %p60 = scmp.ne.s32.totalorder %s52, %s54
      %p61 = scmp.eq.s32.totalorder %s30, 3
      %p62 = por %p60, %p61
      %p63 = scmp.ne.s32.totalorder %s54, %s55
      %p64 = scmp.eq.s32.totalorder %s30, 0
      %p65 = por %p63, %p64
      %p66 = scmp.ne.s32.totalorder %s54, %s55
      %p67 = scmp.eq.s32.totalorder %s31, 3
      %p68 = por %p66, %p67
      %p70 = scmp.ne.s32.totalorder %s55, %s69
      %p71 = scmp.eq.s32.totalorder %s31, 0
      %p72 = por %p70, %p71
      %s73 = smul.u32 %s32, 2
      %s74 = sadd.s32 %s73, %s34
      %p75 = scmp.lt.s32.totalorder %s74, 1
      %s76 = scalar_select %p75, %s74, 1
      %s77 = smul.u32 %s51, 2
      %s78 = sadd.s32 %s77, %s43
      %p79 = scmp.lt.s32.totalorder %s78, 1
      %s80 = scalar_select %p79, %s78, 1
      %s81 = ssub.s32 %s33, %s47
      %s82 = ssub.s32 %s76, %s80
      %s83 = sor.u32 %s81, %s82
      %p84 = scmp.eq.s32.totalorder %s83, 0
      %s86 = sadd.s32 %s85, 1
      %s87 = scalar_select %p84, %s85, %s86
      %p90 = pneg %p84
      %p91 = scmp.eq.s32.totalorder %s25, 3
      %p92 = por %p90, %p91
      %p93 = scmp.ne.s32.totalorder %s85, %s88
      %p94 = scmp.eq.s32.totalorder %s25, 0
      %p95 = por %p93, %p94
      %p96 = scmp.ne.s32.totalorder %s85, %s88
      %p97 = scmp.eq.s32.totalorder %s30, 3
      %p98 = por %p96, %p97
      %p99 = scmp.ne.s32.totalorder %s88, %s89
      %p100 = scmp.eq.s32.totalorder %s30, 0
      %p101 = por %p99, %p100
      %p102 = scmp.ne.s32.totalorder %s88, %s89
      %p103 = scmp.eq.s32.totalorder %s31, 3
      %p104 = por %p102, %p103
      %p106 = scmp.ne.s32.totalorder %s89, %s105
      %p107 = scmp.eq.s32.totalorder %s31, 0
      %p108 = por %p106, %p107
      %s109 = smul.u32 %s32, 2
      %s110 = sadd.s32 %s109, %s34
      %p111 = scmp.lt.s32.totalorder %s110, 1
      %s112 = scalar_select %p111, %s110, 1
      %s113 = smul.u32 %s51, 2
      %s114 = sadd.s32 %s113, %s43
      %p115 = scmp.lt.s32.totalorder %s114, 1
      %s116 = scalar_select %p115, %s114, 1
      %s117 = ssub.s32 %s33, %s47
      %s118 = ssub.s32 %s112, %s116
      %s119 = sor.u32 %s117, %s118
      %p120 = scmp.eq.s32.totalorder %s119, 0
      %s122 = sadd.s32 %s121, 1
      %s123 = scalar_select %p120, %s121, %s122
      %p126 = pneg %p120
      %p127 = scmp.eq.s32.totalorder %s25, 3
      %p128 = por %p126, %p127
      %p129 = scmp.ne.s32.totalorder %s121, %s124
      %p130 = scmp.eq.s32.totalorder %s25, 0
      %p131 = por %p129, %p130
      %p132 = scmp.ne.s32.totalorder %s121, %s124
      %p133 = scmp.eq.s32.totalorder %s30, 3
      %p134 = por %p132, %p133
      %p135 = scmp.ne.s32.totalorder %s124, %s125
      %p136 = scmp.eq.s32.totalorder %s30, 0
      %p137 = por %p135, %p136
      %p138 = scmp.ne.s32.totalorder %s124, %s125
      %p139 = scmp.eq.s32.totalorder %s31, 3
      %p140 = por %p138, %p139
      %p142 = scmp.ne.s32.totalorder %s125, %s141
      %p143 = scmp.eq.s32.totalorder %s31, 0
      %p144 = por %p142, %p143
      %s145 = smul.u32 %s32, 2
      %s146 = sadd.s32 %s145, %s34
      %p147 = scmp.lt.s32.totalorder %s146, 1
      %s148 = scalar_select %p147, %s146, 1
      %s149 = smul.u32 %s51, 2
      %s150 = sadd.s32 %s149, %s43
      %p151 = scmp.lt.s32.totalorder %s150, 1
      %s152 = scalar_select %p151, %s150, 1
      %s153 = ssub.s32 %s33, %s47
      %s154 = ssub.s32 %s148, %s152
      %s155 = sor.u32 %s153, %s154
      %p156 = scmp.eq.s32.totalorder %s155, 0
      %s158 = sadd.s32 %s157, 1
      %s159 = scalar_select %p156, %s157, %s158
      %p162 = pneg %p156
      %p163 = scmp.eq.s32.totalorder %s25, 3
      %p164 = por %p162, %p163
      %p165 = scmp.ne.s32.totalorder %s157, %s160
      %p166 = scmp.eq.s32.totalorder %s25, 0
      %p167 = por %p165, %p166
      %p168 = scmp.ne.s32.totalorder %s157, %s160
      %p169 = scmp.eq.s32.totalorder %s30, 3
      %p170 = por %p168, %p169
      %p171 = scmp.ne.s32.totalorder %s160, %s161
      %p172 = scmp.eq.s32.totalorder %s30, 0
      %p173 = por %p171, %p172
      %p174 = scmp.ne.s32.totalorder %s160, %s161
      %p175 = scmp.eq.s32.totalorder %s31, 3
      %p176 = por %p174, %p175
      %p178 = scmp.ne.s32.totalorder %s161, %s177
      %p179 = scmp.eq.s32.totalorder %s31, 0
      %p180 = por %p178, %p179
      %s181 = smul.u32 %s32, 2
      %s182 = sadd.s32 %s181, %s33
      %s183 = smul.u32 %s51, 2
      %s184 = sadd.s32 %s183, %s47
      %s185 = ssub.s32 %s182, %s184
      %p186 = scmp.eq.s32.totalorder %s185, 0
      %s188 = sadd.s32 %s187, 1
      %s189 = scalar_select %p186, %s187, %s188
      %p192 = pneg %p186
      %p193 = scmp.eq.s32.totalorder %s25, 3
      %p194 = por %p192, %p193
      %p195 = scmp.ne.s32.totalorder %s187, %s190
      %p196 = scmp.eq.s32.totalorder %s25, 0
      %p197 = por %p195, %p196
      %p198 = scmp.ne.s32.totalorder %s187, %s190
      %p199 = scmp.eq.s32.totalorder %s30, 3
      %p200 = por %p198, %p199
      %p201 = scmp.ne.s32.totalorder %s190, %s191
      %p202 = scmp.eq.s32.totalorder %s30, 0
      %p203 = por %p201, %p202
      %p204 = scmp.ne.s32.totalorder %s190, %s191
      %p205 = scmp.eq.s32.totalorder %s31, 3
      %p206 = por %p204, %p205
      %p208 = scmp.ne.s32.totalorder %s191, %s207
      %p209 = scmp.eq.s32.totalorder %s31, 0
      %p210 = por %p208, %p209
      %s211 = smul.u32 %s32, 2
      %s212 = sadd.s32 %s211, %s33
      %s213 = smul.u32 %s51, 2
      %s214 = sadd.s32 %s213, %s47
      %s215 = ssub.s32 %s212, %s214
      %p216 = scmp.eq.s32.totalorder %s215, 0
      %s218 = sadd.s32 %s217, 1
      %s219 = scalar_select %p216, %s217, %s218
      %p222 = pneg %p216
      %p223 = scmp.eq.s32.totalorder %s25, 3
      %p224 = por %p222, %p223
      %p225 = scmp.ne.s32.totalorder %s217, %s220
      %p226 = scmp.eq.s32.totalorder %s25, 0
      %p227 = por %p225, %p226
      %p228 = scmp.ne.s32.totalorder %s217, %s220
      %p229 = scmp.eq.s32.totalorder %s30, 3
      %p230 = por %p228, %p229
      %p231 = scmp.ne.s32.totalorder %s220, %s221
      %p232 = scmp.eq.s32.totalorder %s30, 0
      %p233 = por %p231, %p232
      %p234 = scmp.ne.s32.totalorder %s220, %s221
      %p235 = scmp.eq.s32.totalorder %s31, 3
      %p236 = por %p234, %p235
      %p238 = scmp.ne.s32.totalorder %s221, %s237
      %p239 = scmp.eq.s32.totalorder %s31, 0
      %p240 = por %p238, %p239
      %p241 = scmp.le.s32.totalorder 1, %s25
      %p242 = scmp.lt.s32.totalorder %s25, 5
      %p243 = pnand %p241, %p242
      %p244 = pneg %p243
      // Predicated region
      $region9: #{tpu_custom_call.1} parent=5 // pred_check
        _
      $region10: #{tpu_custom_call.1} parent=5 // pred_check_branch
        %246 = sbr.rel (%p243) target = $region12
      $region11: #{tpu_custom_call.1} parent=5 // pred_region
        %s247 = ssub.s32 %s25, 1
        // Predicated region
        $region13: #{tpu_custom_call.1} parent=11 // pred_check
          %p248 = pneg %p65
        $region14: #{tpu_custom_call.1} parent=11 // pred_check_branch
          %250 = sbr.rel (%p248) target = $region16
        $region15: #{tpu_custom_call.1} parent=11 // pred_region
          %252 = vsyncadd [#allocation3], 0
          %s254 = sshll.u32 %s0, 4
          %s255 = int_to_ptr.hbm [resolvable:$true] %s254
          %s256 = sshll.u32 [#allocation2], 4
          %s257 = int_to_ptr.vmem [resolvable:$true] %s256
          %259 = dma.hbm_to_vmem [thread:$0]  %s255, 128, %s257, [#allocation3]
        $region16: #{tpu_custom_call.1} parent=11 // pred_fallthru
          _
      $region12: #{tpu_custom_call.1} parent=5 // pred_fallthru
        _
      %p260 = scmp.lt.s32.totalorder %s25, 4
      // Predicated region
      $region17: #{tpu_custom_call.1} parent=5 // pred_check
        %p261 = pneg %p260
      $region18: #{tpu_custom_call.1} parent=5 // pred_check_branch
        %263 = sbr.rel (%p261) target = $region20
      $region19: #{tpu_custom_call.1} parent=5 // pred_region
        // Predicated region
        $region21: #{tpu_custom_call.1} parent=19 // pred_check
          %p264 = pneg %p95
        $region22: #{tpu_custom_call.1} parent=19 // pred_check_branch
          %266 = sbr.rel (%p264) target = $region24
        $region23: #{tpu_custom_call.1} parent=19 // pred_region
          %s267 = sand.u32 %s25, 1
          %s268 = scalar_lea.sflag [#allocation6], %s267
          %s269 = sand.u32 %s85, 1
          %s270 = smul.addr %s269, 8
          %s271 = scalar_lea.vmem [#allocation5], %s270
          %s272 = smul.u32 %s32, 2
          %s273 = sadd.s32 %s272, %s34
          %p274 = scmp.lt.s32.totalorder %s273, 1
          %s275 = scalar_select %p274, %s273, 1
          %277 = vsyncadd %s268, 0
          %s278 = smul.addr %s33, 2
          %s279 = sadd.s32 %s275, %s278
          %s280 = smul.addr %s279, 8
          %s281 = scalar_lea.hbm %s1, %s280
          %s283 = sshll.u32 %s281, 4
          %s284 = int_to_ptr.hbm [resolvable:$true] %s283
          %s285 = sshll.u32 %s271, 4
          %s286 = int_to_ptr.vmem [resolvable:$true] %s285
          %288 = dma.hbm_to_vmem [thread:$0]  %s284, 128, %s286, %s268
        $region24: #{tpu_custom_call.1} parent=19 // pred_fallthru
          _
        // Predicated region
        $region25: #{tpu_custom_call.1} parent=19 // pred_check
          %p289 = pneg %p131
        $region26: #{tpu_custom_call.1} parent=19 // pred_check_branch
          %291 = sbr.rel (%p289) target = $region28
        $region27: #{tpu_custom_call.1} parent=19 // pred_region
          %s292 = sand.u32 %s25, 1
          %s293 = scalar_lea.sflag [#allocation6], %s292
          %s294 = sand.u32 %s121, 1
          %s295 = scalar_lea.vmem [#allocation7], %s294
          %s296 = smul.u32 %s32, 2
          %s297 = sadd.s32 %s296, %s34
          %p298 = scmp.lt.s32.totalorder %s297, 1
          %s299 = scalar_select %p298, %s297, 1
          %301 = vsyncadd %s293, 0
          %s302 = smul.addr %s33, 2
          %s303 = sadd.s32 %s299, %s302
          %s304 = scalar_lea.hbm %s2, %s303
          %s306 = sshll.u32 %s304, 4
          %s307 = int_to_ptr.hbm [resolvable:$true] %s306
          %s308 = sshll.u32 %s295, 4
          %s309 = int_to_ptr.vmem [resolvable:$true] %s308
          %311 = dma.hbm_to_vmem [thread:$0]  %s307, 16, %s309, %s293
        $region28: #{tpu_custom_call.1} parent=19 // pred_fallthru
          _
        // Predicated region
        $region29: #{tpu_custom_call.1} parent=19 // pred_check
          %p312 = pneg %p167
        $region30: #{tpu_custom_call.1} parent=19 // pred_check_branch
          %314 = sbr.rel (%p312) target = $region32
        $region31: #{tpu_custom_call.1} parent=19 // pred_region
          %s315 = sand.u32 %s157, 1
          %s316 = scalar_lea.sflag [#allocation9], %s315
          %s317 = sand.u32 %s157, 1
          %s318 = scalar_lea.vmem [#allocation8], %s317
          %s319 = smul.u32 %s32, 2
          %s320 = sadd.s32 %s319, %s34
          %p321 = scmp.lt.s32.totalorder %s320, 1
          %s322 = scalar_select %p321, %s320, 1
          %324 = vsyncadd %s316, 0
          %s325 = smul.addr %s33, 2
          %s326 = sadd.s32 %s322, %s325
          %s327 = scalar_lea.hbm %s3, %s326
          %s329 = sshll.u32 %s327, 4
          %s330 = int_to_ptr.hbm [resolvable:$true] %s329
          %s331 = sshll.u32 %s318, 4
          %s332 = int_to_ptr.vmem [resolvable:$true] %s331
          %334 = dma.hbm_to_vmem [thread:$0]  %s330, 16, %s332, %s316
        $region32: #{tpu_custom_call.1} parent=19 // pred_fallthru
          _
      $region20: #{tpu_custom_call.1} parent=5 // pred_fallthru
        _
      %p335 = scmp.le.s32.totalorder 1, %s25
      %p336 = scmp.lt.s32.totalorder %s25, 5
      %p337 = pnand %p335, %p336
      %p338 = pneg %p337
      // Predicated region
      $region33: #{tpu_custom_call.1} parent=5 // pred_check
        _
      $region34: #{tpu_custom_call.1} parent=5 // pred_check_branch
        %340 = sbr.rel (%p337) target = $region36
      $region35: #{tpu_custom_call.1} parent=5 // pred_region
        %s341 = ssub.s32 %s25, 1
        // Predicated region
        $region37: #{tpu_custom_call.1} parent=35 // pred_check
          %p342 = pneg %p65
        $region38: #{tpu_custom_call.1} parent=35 // pred_check_branch
          %344 = sbr.rel (%p342) target = $region40
        $region39: #{tpu_custom_call.1} parent=35 // pred_region
          %346 = dma.done [#allocation3], 128
        $region40: #{tpu_custom_call.1} parent=35 // pred_fallthru
          _
        %s347 = sand.u32 %s30, 1
        %s348 = scalar_lea.sflag [#allocation6], %s347
        %s349 = sand.u32 %s88, 1
        %s350 = smul.addr %s349, 8
        %s351 = scalar_lea.vmem [#allocation5], %s350
        // Predicated region
        $region41: #{tpu_custom_call.1} parent=35 // pred_check
          %p352 = pneg %p101
        $region42: #{tpu_custom_call.1} parent=35 // pred_check_branch
          %354 = sbr.rel (%p352) target = $region44
        $region43: #{tpu_custom_call.1} parent=35 // pred_region
          %356 = dma.done %s348, 128
        $region44: #{tpu_custom_call.1} parent=35 // pred_fallthru
          _
        %s357 = sand.u32 %s30, 1
        %s358 = scalar_lea.sflag [#allocation6], %s357
        %s359 = sand.u32 %s124, 1
        %s360 = scalar_lea.vmem [#allocation7], %s359
        // Predicated region
        $region45: #{tpu_custom_call.1} parent=35 // pred_check
          %p361 = pneg %p137
        $region46: #{tpu_custom_call.1} parent=35 // pred_check_branch
          %363 = sbr.rel (%p361) target = $region48
        $region47: #{tpu_custom_call.1} parent=35 // pred_region
          %365 = dma.done %s358, 16
        $region48: #{tpu_custom_call.1} parent=35 // pred_fallthru
          _
        %s366 = sand.u32 %s160, 1
        %s367 = scalar_lea.sflag [#allocation9], %s366
        %s368 = sand.u32 %s160, 1
        %s369 = scalar_lea.vmem [#allocation8], %s368
        // Predicated region
        $region49: #{tpu_custom_call.1} parent=35 // pred_check
          %p370 = pneg %p173
        $region50: #{tpu_custom_call.1} parent=35 // pred_check_branch
          %372 = sbr.rel (%p370) target = $region52
        $region51: #{tpu_custom_call.1} parent=35 // pred_region
          %374 = dma.done %s367, 16
        $region52: #{tpu_custom_call.1} parent=35 // pred_fallthru
          _
        %p375 = pneg %p65
        %p376 = pneg %p62
        %s377 = sand.u32 %s30, 1
        %s378 = scalar_lea.sflag [#allocation6], %s377
        %s379 = sand.u32 %s88, 1
        %s380 = smul.addr %s379, 8
        %s381 = scalar_lea.vmem [#allocation5], %s380
        %p382 = pneg %p101
        %p383 = pneg %p98
        %s384 = sand.u32 %s30, 1
        %s385 = scalar_lea.sflag [#allocation6], %s384
        %s386 = sand.u32 %s124, 1
        %s387 = scalar_lea.vmem [#allocation7], %s386
        %p388 = pneg %p137
        %p389 = pneg %p134
        %s390 = sand.u32 %s160, 1
        %s391 = scalar_lea.sflag [#allocation9], %s390
        %s392 = sand.u32 %s160, 1
        %s393 = scalar_lea.vmem [#allocation8], %s392
        %p394 = pneg %p173
        %p395 = pneg %p170
        %p396 = pneg %p203
        %p397 = pneg %p200
        %s398 = sand.u32 %s190, 1
        %s399 = scalar_lea.sflag [#allocation4], %s398
        %s400 = sand.u32 %s190, 1
        %s401 = scalar_lea.vmem [#allocation10], %s400
        %p402 = pneg %p233
        %p403 = pneg %p230
        %s404 = sand.u32 %s220, 1
        %s405 = scalar_lea.sflag [#allocation12], %s404
        %s406 = sand.u32 %s220, 1
        %s407 = scalar_lea.vmem [#allocation11], %s406
        %s408 = smul.u32 %s35, 2
        %s409 = sadd.s32 %s408, %s37
        %p410 = scmp.lt.s32.totalorder %s409, 1
        %s411 = scalar_select %p410, %s409, 1
        %s412 = smul.u32 %s35, 2
        %s413 = sadd.s32 %s412, %s37
        %p414 = scmp.lt.s32.totalorder %s413, 1
        %s415 = scalar_select %p414, %s413, 1
        %s416 = smul.u32 %s35, 2
        %s417 = sadd.s32 %s416, %s37
        %p418 = scmp.lt.s32.totalorder %s417, 1
        %s419 = scalar_select %p418, %s417, 1
        %s420 = smul.u32 %s35, 2
        %s421 = sadd.s32 %s420, %s36
        %s422 = smul.u32 %s35, 2
        %s423 = sadd.s32 %s422, %s36
        %p425 = scmp.eq.s32.totalorder %s37, 0
        // Predicated region
        $region53: #{tpu_custom_call.1} parent=35 // pred_check
          %p426 = pneg %p425
        $region54: #{tpu_custom_call.1} parent=35 // pred_check_branch
          %428 = sbr.rel (%p426) target = $region56
        $region55: #{tpu_custom_call.1} parent=35 // pred_region
          %429 = vst [vmem:[%s401] sm:$0x1] 0.0
          %430 = vst [vmem:[%s407] sm:$0x1] 0.0
        $region56: #{tpu_custom_call.1} parent=35 // pred_fallthru
          _
        %v431 = vlaneseq
        %v432 = vand.u32 %v431, 127
        %s433 = smul.u32 %s35, 2
        %s434 = sadd.s32 %s433, %s37
        %s435 = smul.u32 %s434, 128
        %v436 = vstv %s435
        %v437 = vadd.s32 %v436, %v432
        %vm438 = vcmp.lt.s32.totalorder %v437, 255
        %v439 = vld [vmem:[%s351] sm:$0xff]
        %v440 = vrot.slane %v439, 4
        %v441 = vmax.f32 %v439, %v440
        %v442 = vrot.slane %v441, 2
        %v443 = vmax.f32 %v441, %v442
        %v444 = vrot.slane %v443, 1
        %v445 = vmax.f32 %v443, %v444
        %v446 = vsub.f32 %v439, %v445
        %v447 = vmul.f32 %v446, 1.442695
        %v448 = vpow.pop %v447
        %v449 = vrot.slane %v448, 4
        %v450 = vadd.f32 %v448, %v449
        %v451 = vrot.slane %v450, 2
        %v452 = vadd.f32 %v450, %v451
        %v453 = vrot.slane %v452, 1
        %v454 = vadd.f32 %v452, %v453
        %v455 = vlog2.pop %v454
        %v456 = vmul.f32 %v455, 0.6931472
        %v457 = vld [vmem:[#allocation2] sm:$0xff]
        %v458 = vpack.c.bf16 %v457, %v457
        %v459 = vpack.c.bf16 %v446, %v446
        %vm460 = vcmask 64512
        %v462 = vsel %vm460, %v458, 0
        %vm464 = vcmask 1043456
        %v466 = vsel %vm464, %v459, 0
        %468 = vmatpush.bf16.msra.mxu0 0
        %469 = vmatpush.bf16.msra.mxu0 0
        %470 = vmatpush.bf16.msra.mxu0 0
        %471 = vmatpush.bf16.msra.mxu0 0
        %472 = vmatpush.bf16.msra.mxu0 0
        %473 = vmatpush.bf16.msra.mxu0 0
        %474 = vmatpush.bf16.msra.mxu0 0
        %475 = vmatpush.bf16.msra.mxu0 %v466
        %476 = vmatmul.bf16.gmra.mxu0 %v462
        %v477 = vpop.f32.mrf.mxu0
        %v478 = vadd.f32 0.0, %v477
        %v479 = vpop.f32.mrf.mxu0
        %480 = vdwg.mxu0
        %v481 = vld [vmem:[%s360] sm:$0x1]
        %v482 = vlaneseq
        %v483 = vshrl.u32 %v482, 7
        %v484 = vperm.slane %v481, 0
        %vm485 = vcmp.eq.s32.totalorder %v483, %v484
        %v486 = vsel %vm485, %v478, 0.0
        %v487 = vrot.slane %v486, 4
        %v488 = vadd.f32 %v486, %v487
        %v489 = vrot.slane %v488, 2
        %v490 = vadd.f32 %v488, %v489
        %v491 = vrot.slane %v490, 1
        %v492 = vadd.f32 %v490, %v491
        %vm493 = vcmp.ge.s32.totalorder %v481, 0
        %vm494 = vmand %vm438, %vm493
        %vm495 = vcmp.lt.s32.totalorder %v481, 8
        %vm496 = vmand %vm494, %vm495
        %v497 = vld [vmem:[%s401] sm:$0x1]
        %v498 = vsub.f32 %v492, %v456
        %v499 = vsel %vm496, %v498, 0.0
        %v500 = vadd.f32 %v497, %v499
        %501 = vst [vmem:[%s401] sm:$0x1] %v500
        %v502 = vld [vmem:[%s407] sm:$0x1]
        %v503 = vld [vmem:[%s369] sm:$0x1]
        %vm504 = vcmp.gt.f32.partialorder %v503, 0.0
        %vm505 = vmand %vm438, %vm504
        %v506 = vsel %vm505, 1, 0
        %v507 = vcvt.s32.f32 %v506
        %v508 = vadd.f32 %v502, %v507
        %509 = vst [vmem:[%s407] sm:$0x1] %v508
        %s510 = sand.u32 %s190, 1
        %s511 = scalar_lea.sflag [#allocation4], %s510
        %s512 = sand.u32 %s190, 1
        %s513 = scalar_lea.vmem [#allocation10], %s512
        %s514 = sand.u32 %s220, 1
        %s515 = scalar_lea.sflag [#allocation12], %s514
        %s516 = sand.u32 %s220, 1
        %s517 = scalar_lea.vmem [#allocation11], %s516
        // Predicated region
        $region57: #{tpu_custom_call.1} parent=35 // pred_check
          %p518 = pneg %p200
        $region58: #{tpu_custom_call.1} parent=35 // pred_check_branch
          %520 = sbr.rel (%p518) target = $region60
        $region59: #{tpu_custom_call.1} parent=35 // pred_region
          %s521 = smul.u32 %s35, 2
          %s522 = sadd.s32 %s521, %s36
          %524 = vsyncadd %s511, 0
          %s525 = scalar_lea.hbm %s4, %s522
          %s527 = sshll.u32 %s513, 4
          %s528 = int_to_ptr.vmem [resolvable:$true] %s527
          %s529 = sshll.u32 %s525, 4
          %s530 = int_to_ptr.hbm [resolvable:$true] %s529
          %532 = dma.vmem_to_hbm [thread:$0]  %s528, 16, %s530, %s511
        $region60: #{tpu_custom_call.1} parent=35 // pred_fallthru
          _
        // Predicated region
        $region61: #{tpu_custom_call.1} parent=35 // pred_check
          %p533 = pneg %p230
        $region62: #{tpu_custom_call.1} parent=35 // pred_check_branch
          %535 = sbr.rel (%p533) target = $region64
        $region63: #{tpu_custom_call.1} parent=35 // pred_region
          %s536 = smul.u32 %s35, 2
          %s537 = sadd.s32 %s536, %s36
          %539 = vsyncadd %s515, 0
          %s540 = scalar_lea.hbm %s5, %s537
          %s542 = sshll.u32 %s517, 4
          %s543 = int_to_ptr.vmem [resolvable:$true] %s542
          %s544 = sshll.u32 %s540, 4
          %s545 = int_to_ptr.hbm [resolvable:$true] %s544
          %547 = dma.vmem_to_hbm [thread:$0]  %s543, 16, %s545, %s515
        $region64: #{tpu_custom_call.1} parent=35 // pred_fallthru
          _
      $region36: #{tpu_custom_call.1} parent=5 // pred_fallthru
        _
      %p548 = scmp.le.s32.totalorder 2, %s25
      // Predicated region
      $region65: #{tpu_custom_call.1} parent=5 // pred_check
        %p549 = pneg %p548
      $region66: #{tpu_custom_call.1} parent=5 // pred_check_branch
        %551 = sbr.rel (%p549) target = $region68
      $region67: #{tpu_custom_call.1} parent=5 // pred_region
        %s552 = ssub.s32 %s25, 2
        // Predicated region
        $region69: #{tpu_custom_call.1} parent=67 // pred_check
          %p553 = pneg %p206
        $region70: #{tpu_custom_call.1} parent=67 // pred_check_branch
          %555 = sbr.rel (%p553) target = $region72
        $region71: #{tpu_custom_call.1} parent=67 // pred_region
          %s556 = sand.u32 %s191, 1
          %s557 = scalar_lea.sflag [#allocation4], %s556
          %s558 = sand.u32 %s191, 1
          %s559 = scalar_lea.vmem [#allocation10], %s558
          %561 = dma.done %s557, 16
        $region72: #{tpu_custom_call.1} parent=67 // pred_fallthru
          _
        // Predicated region
        $region73: #{tpu_custom_call.1} parent=67 // pred_check
          %p562 = pneg %p236
        $region74: #{tpu_custom_call.1} parent=67 // pred_check_branch
          %564 = sbr.rel (%p562) target = $region76
        $region75: #{tpu_custom_call.1} parent=67 // pred_region
          %s565 = sand.u32 %s221, 1
          %s566 = scalar_lea.sflag [#allocation12], %s565
          %s567 = sand.u32 %s221, 1
          %s568 = scalar_lea.vmem [#allocation11], %s567
          %570 = dma.done %s566, 16
        $region76: #{tpu_custom_call.1} parent=67 // pred_fallthru
          _
      $region68: #{tpu_custom_call.1} parent=5 // pred_fallthru
        _
    $region6: #{tpu_custom_call.1} parent=1 // loop_footer
      %s29 = sadd.s32 1, %s25
    $region7: #{tpu_custom_call.1} parent=1 // loop_footer_branch
      %24 = sbr.rel target = $region3
    $region8: #{tpu_custom_call.1} parent=1 // loop_exit
      _
    %571 = vsyncpa [#allocation3], 1
    %s572 = scalar_lea.sflag [#allocation3], 1
    %573 = vsyncpa %s572, 1
    %574 = vsyncpa [#allocation6], 1
    %s575 = scalar_lea.sflag [#allocation6], 1
    %576 = vsyncpa %s575, 1
    %577 = vsyncpa [#allocation9], 1
    %s578 = scalar_lea.sflag [#allocation9], 1
    %579 = vsyncpa %s578, 1
    %580 = vsyncpa [#allocation4], 1
    %s581 = scalar_lea.sflag [#allocation4], 1
    %582 = vsyncpa %s581, 1
    %583 = vsyncpa [#allocation12], 1
    %s584 = scalar_lea.sflag [#allocation12], 1
    %585 = vsyncpa %s584, 1

</llo_original>
